<compile_context>
chip_gen: v7x
topology: tpu7x:2x2x1
jax: 0.10.0
libtpu: 0.0.40
codegen_flags: <defaults>
</compile_context>

<pallas_src>
import functools

import jax
import jax.numpy as jnp
from jax.experimental import pallas as pl
from jax.experimental.pallas import tpu as pltpu


def _coupling_kernel(n_layers, hidden, feat, x_ref, mask_ref, omm_ref, *refs):
    # refs = W[0..n_layers-1] (f32, (out, in)), b[0..n_layers-1] (f32, (out, 1)),
    #        out_ref (f32, (2D, TILE_B)) with rows [0:D)=u, [D:2D)=ldj.
    Ws = refs[0:n_layers]
    bs = refs[n_layers:2 * n_layers]
    out_ref = refs[2 * n_layers]

    x = x_ref[...].astype(jnp.float32)          # (D, TILE_B), batch on lanes
    mask = mask_ref[...]                        # (D, 1), broadcasts over lanes
    omm = omm_ref[...]                          # (D, 1), = 1 - mask
    mx = x * mask                               # (D, TILE_B)

    # Layer 0 of the fused net: [s_W0; t_W0] @ mx -> (2H, TILE_B)
    h = jnp.dot(Ws[0][...], mx, preferred_element_type=jnp.float32) + bs[0][...]

    # Remaining layers: per-half activation split on the sublane axis (rows),
    # then one block-diagonal matmul per layer.  tanh only on the s-half rows,
    # ReLU only on the t-half rows (no wasted EUP work, no lane masks).
    for i in range(1, n_layers):
        a = jnp.concatenate(
            [jnp.tanh(h[:hidden, :]), jnp.maximum(h[hidden:, :], 0.0)], axis=0)
        h = jnp.dot(Ws[i][...], a, preferred_element_type=jnp.float32) + bs[i][...]

    # Final layer produced [s; t] stacked along sublanes: (2D, TILE_B).
    s = h[:feat, :]
    t = h[feat:, :]

    u = mx + omm * (x - t) * jnp.exp(-s)
    ldj = -omm * s

    # Fused lane-dense output slab: rows [0:D)=u, rows [D:2D)=ldj.
    out_ref[:feat, :] = u.astype(out_ref.dtype)
    out_ref[feat:, :] = ldj.astype(out_ref.dtype)


def _pack_params(s_Ws, s_bs, t_Ws, t_bs):
    """Fuse s-net and t-net weights for the transposed (out, in) layout.

    Layer 0: concat along out (stacked rows); later layers: block-diagonal.
    Input convention: s_Ws[i]/t_Ws[i] are (in, out), biases are (out,).
    """
    n_layers = len(s_Ws)
    Ws = [jnp.concatenate([s_Ws[0], t_Ws[0]], axis=1).T]            # (2H, D)
    bs = [jnp.concatenate([s_bs[0], t_bs[0]], axis=0)]
    for i in range(1, n_layers):
        Ws.append(jax.scipy.linalg.block_diag(s_Ws[i], t_Ws[i]).T)  # (2H,2H)/(2D,2H)
        bs.append(jnp.concatenate([s_bs[i], t_bs[i]], axis=0))
    Ws = [w.astype(jnp.float32) for w in Ws]
    bs = [b.reshape(-1, 1).astype(jnp.float32) for b in bs]
    return Ws, bs


def linear_masked_coupling_forward(x, mask, s_Ws, s_bs, t_Ws, t_bs, *, tile_b=2048):
    """Forward pass with y=None (no conditioning labels).

    x: (B, D) float32, mask: (D,) float32, weights (in, out), biases (out,).
    Returns (u, log_abs_det_jacobian), both (B, D) float32.
    """
    # TODO(synk): conditional path (y is not None -> concat([y, mx], dim=1)) not
    # implemented; it would only widen the first-layer input.
    B, D = x.shape
    H = s_Ws[0].shape[1]
    n_layers = len(s_Ws)

    Ws, bs = _pack_params(s_Ws, s_bs, t_Ws, t_bs)

    # Batch tile sits on the lane axis -> multiple of 128.  Large default tile
    # amortizes per-grid-step overhead; VMEM is nowhere near limiting (a
    # (2048, 16) f32 tile is 128 KiB).  Clamp so small batches aren't padded
    # far, and so large batches get >= 2 grid steps (v7x: two TensorCores).
    tile_b = max(128, (min(int(tile_b), 8192) // 128) * 128)
    b_lane = ((B + 127) // 128) * 128
    tile_b = min(tile_b, b_lane)
    if b_lane >= 256:
        half = ((((B + 1) // 2) + 127) // 128) * 128
        tile_b = min(tile_b, max(128, half))
    Bp = ((B + tile_b - 1) // tile_b) * tile_b

    # Transposed (lane-dense) layout: batch on the last axis.
    xT = x.T.astype(jnp.float32)                 # (D, B)
    if Bp != B:
        xT = jnp.pad(xT, ((0, 0), (0, Bp - B)))

    mask_c = mask.reshape(D, 1).astype(jnp.float32)
    omm_c = 1.0 - mask_c

    grid = (Bp // tile_b,)

    x_spec = pl.BlockSpec((D, tile_b), lambda i: (0, i))
    const_spec = lambda shape: pl.BlockSpec(shape, lambda i: (0, 0))
    in_specs = [x_spec, const_spec((D, 1)), const_spec((D, 1))]
    in_specs += [const_spec(W.shape) for W in Ws]
    in_specs += [const_spec(b.shape) for b in bs]
    out_spec = pl.BlockSpec((2 * D, tile_b), lambda i: (0, i))
    out_shape = jax.ShapeDtypeStruct((2 * D, Bp), jnp.float32)

    # Advisory cost estimate (nominal fused-matmul FLOPs).
    flops = 2 * Bp * (D * 2 * H + (n_layers - 2) * (2 * H) * (2 * H) + 2 * H * 2 * D)
    transcendentals = Bp * ((n_layers - 1) * H + D)      # tanh on s-half + exp
    bytes_accessed = (Bp * D * 4 + Bp * 2 * D * 4        # x in, [u;ldj] out
                      + sum(int(W.size) * 4 for W in Ws)
                      + sum(int(b.size) * 4 for b in bs)
                      + 2 * D * 4)                       # mask, 1-mask

    kernel = functools.partial(_coupling_kernel, n_layers, H, D)
    out = pl.pallas_call(
        kernel,
        out_shape=out_shape,
        grid=grid,
        in_specs=in_specs,
        out_specs=out_spec,
        compiler_params=pltpu.CompilerParams(
            dimension_semantics=("parallel",)),
        cost_estimate=pl.CostEstimate(flops=flops,
                                      transcendentals=transcendentals,
                                      bytes_accessed=bytes_accessed),
    )(xT, mask_c, omm_c, *Ws, *bs)

    u = out[:D, :B].T
    ldj = out[D:, :B].T
    return u, ldj


# ----------------------------- reference -------------------------------------


def _reference_forward_f32(x, mask, s_Ws, s_bs, t_Ws, t_bs):
    hp = jax.lax.Precision.HIGHEST
    mx = x * mask
    h = jnp.dot(mx, s_Ws[0], precision=hp) + s_bs[0]
    for i in range(1, len(s_Ws)):
        h = jnp.dot(jnp.tanh(h), s_Ws[i], precision=hp) + s_bs[i]
    s = h
    h = jnp.dot(mx, t_Ws[0], precision=hp) + t_bs[0]
    for i in range(1, len(t_Ws)):
        h = jnp.dot(jnp.maximum(h, 0.0), t_Ws[i], precision=hp) + t_bs[i]
    t = h
    u = mx + (1.0 - mask) * (x - t) * jnp.exp(-s)
    ldj = -(1.0 - mask) * s
    return u, ldj


if __name__ == "__main__":
    # Shapes implied by the module: input_size=16, hidden_size=32, n_hidden=2.
    # B=192 exercises both batch padding (to 256) and a 2-step pipelined grid.
    B, D, H, n_hidden = 192, 16, 32, 2
    n_layers = n_hidden + 2        # Linear(D,H), n_hidden x Linear(H,H), Linear(H,D)

    key = jax.random.PRNGKey(0)
    keys = jax.random.split(key, 1 + n_layers)

    x = jax.random.normal(keys[0], (B, D), dtype=jnp.float32)
    mask = (jnp.arange(D) % 2).astype(jnp.float32)   # alternating RealNVP mask buffer

    in_dims = [D] + [H] * (n_hidden + 1)
    out_dims = [H] * (n_hidden + 1) + [D]

    def init_linear(kw, kb, fan_in, fan_out):
        # PyTorch nn.Linear default: U(-1/sqrt(fan_in), 1/sqrt(fan_in))
        bound = 1.0 / (fan_in ** 0.5)
        W = jax.random.uniform(kw, (fan_in, fan_out), jnp.float32, -bound, bound)
        b = jax.random.uniform(kb, (fan_out,), jnp.float32, -bound, bound)
        return W, b

    s_Ws, s_bs = [], []
    for i in range(n_layers):
        kw, kb = jax.random.split(keys[1 + i])
        W, b = init_linear(kw, kb, in_dims[i], out_dims[i])
        s_Ws.append(W)
        s_bs.append(b)

    # t_net = copy.deepcopy(s_net) in __init__ -> identical initial weights,
    # only the activations differ (ReLU instead of Tanh).
    t_Ws = [jnp.array(W) for W in s_Ws]
    t_bs = [jnp.array(b) for b in s_bs]

    u, ldj = linear_masked_coupling_forward(x, mask, s_Ws, s_bs, t_Ws, t_bs)
    jax.block_until_ready((u, ldj))

    assert u.shape == (B, D) and ldj.shape == (B, D)

    # Full-f32 module semantics (kernel now runs f32 matmuls too).
    u_ref, ldj_ref = _reference_forward_f32(x, mask, s_Ws, s_bs, t_Ws, t_bs)
    assert jnp.allclose(u, u_ref, atol=5e-3, rtol=5e-3), "u mismatch (f32 ref)"
    assert jnp.allclose(ldj, ldj_ref, atol=5e-3, rtol=5e-3), "ldj mismatch (f32 ref)"

    print("KERNEL_OK")
</pallas_src>

<mosaic_0001>
module attributes {stable_mosaic.version = 11 : i64} {
  func.func @_coupling_kernel(%arg0: i32, %arg1: memref<16x128xf32, #tpu.memory_space<vmem>>, %arg2: memref<16x1xf32, #tpu.memory_space<vmem>>, %arg3: memref<16x1xf32, #tpu.memory_space<vmem>>, %arg4: memref<64x16xf32, #tpu.memory_space<vmem>>, %arg5: memref<64x64xf32, #tpu.memory_space<vmem>>, %arg6: memref<64x64xf32, #tpu.memory_space<vmem>>, %arg7: memref<32x64xf32, #tpu.memory_space<vmem>>, %arg8: memref<64x1xf32, #tpu.memory_space<vmem>>, %arg9: memref<64x1xf32, #tpu.memory_space<vmem>>, %arg10: memref<64x1xf32, #tpu.memory_space<vmem>>, %arg11: memref<32x1xf32, #tpu.memory_space<vmem>>, %arg12: memref<32x128xf32, #tpu.memory_space<vmem>>) attributes {dimension_semantics = [#tpu.dimension_semantics<parallel>], iteration_bounds = array<i64: 2>, scalar_prefetch = 0 : i64, scratch_operands = 0 : i64, tpu.core_type = #tpu.core_type<tc>, window_params = [{transform_indices = @transform_0, window_bounds = array<i64: 16, 128>}, {pipeline_mode = #tpu.pipeline_mode<synchronous>, transform_indices = @transform_1, window_bounds = array<i64: 16, 1>}, {pipeline_mode = #tpu.pipeline_mode<synchronous>, transform_indices = @transform_2, window_bounds = array<i64: 16, 1>}, {pipeline_mode = #tpu.pipeline_mode<synchronous>, transform_indices = @transform_3, window_bounds = array<i64: 64, 16>}, {pipeline_mode = #tpu.pipeline_mode<synchronous>, transform_indices = @transform_4, window_bounds = array<i64: 64, 64>}, {pipeline_mode = #tpu.pipeline_mode<synchronous>, transform_indices = @transform_5, window_bounds = array<i64: 64, 64>}, {pipeline_mode = #tpu.pipeline_mode<synchronous>, transform_indices = @transform_6, window_bounds = array<i64: 32, 64>}, {pipeline_mode = #tpu.pipeline_mode<synchronous>, transform_indices = @transform_7, window_bounds = array<i64: 64, 1>}, {pipeline_mode = #tpu.pipeline_mode<synchronous>, transform_indices = @transform_8, window_bounds = array<i64: 64, 1>}, {pipeline_mode = #tpu.pipeline_mode<synchronous>, transform_indices = @transform_9, window_bounds = array<i64: 64, 1>}, {pipeline_mode = #tpu.pipeline_mode<synchronous>, transform_indices = @transform_10, window_bounds = array<i64: 32, 1>}, {transform_indices = @transform_11, window_bounds = array<i64: 32, 128>}]} {
    %c0 = arith.constant 0 : index
    %c0_0 = arith.constant 0 : index
    %0 = vector.load %arg1[%c0, %c0_0] : memref<16x128xf32, #tpu.memory_space<vmem>>, vector<16x128xf32>
    %c0_1 = arith.constant 0 : index
    %c0_2 = arith.constant 0 : index
    %1 = vector.load %arg2[%c0_1, %c0_2] : memref<16x1xf32, #tpu.memory_space<vmem>>, vector<16x1xf32>
    %c0_3 = arith.constant 0 : index
    %c0_4 = arith.constant 0 : index
    %2 = vector.load %arg3[%c0_3, %c0_4] : memref<16x1xf32, #tpu.memory_space<vmem>>, vector<16x1xf32>
    %3 = vector.broadcast %1 : vector<16x1xf32> to vector<16x128xf32>
    %4 = arith.mulf %0, %3 : vector<16x128xf32>
    %c0_5 = arith.constant 0 : index
    %c0_6 = arith.constant 0 : index
    %5 = vector.load %arg4[%c0_5, %c0_6] : memref<64x16xf32, #tpu.memory_space<vmem>>, vector<64x16xf32>
    %cst = arith.constant dense<0.000000e+00> : vector<64x128xf32>
    %6 = tpu.matmul %5, %4, %cst {dimension_numbers = #tpu.dot_dimension_numbers<[1], [0], [0], [1], [0, 0, 1, 1], [], []>} : vector<64x16xf32>, vector<16x128xf32>, vector<64x128xf32> -> vector<64x128xf32>
    %c0_7 = arith.constant 0 : index
    %c0_8 = arith.constant 0 : index
    %7 = vector.load %arg8[%c0_7, %c0_8] : memref<64x1xf32, #tpu.memory_space<vmem>>, vector<64x1xf32>
    %8 = vector.broadcast %7 : vector<64x1xf32> to vector<64x128xf32>
    %9 = arith.addf %6, %8 : vector<64x128xf32>
    %10 = vector.extract_strided_slice %9 {offsets = [0, 0], sizes = [32, 128], strides = [1, 1]} : vector<64x128xf32> to vector<32x128xf32>
    %11 = math.tanh %10 : vector<32x128xf32>
    %12 = vector.extract_strided_slice %9 {offsets = [32, 0], sizes = [32, 128], strides = [1, 1]} : vector<64x128xf32> to vector<32x128xf32>
    %cst_9 = arith.constant 0.000000e+00 : f32
    %13 = vector.broadcast %cst_9 : f32 to vector<32x128xf32>
    %14 = arith.maximumf %12, %13 : vector<32x128xf32>
    %15 = tpu.concatenate %11, %14 in 0 : vector<32x128xf32>, vector<32x128xf32> -> vector<64x128xf32>
    %c0_10 = arith.constant 0 : index
    %c0_11 = arith.constant 0 : index
    %16 = vector.load %arg5[%c0_10, %c0_11] : memref<64x64xf32, #tpu.memory_space<vmem>>, vector<64x64xf32>
    %cst_12 = arith.constant dense<0.000000e+00> : vector<64x128xf32>
    %17 = tpu.matmul %16, %15, %cst_12 {dimension_numbers = #tpu.dot_dimension_numbers<[1], [0], [0], [1], [0, 0, 1, 1], [], []>} : vector<64x64xf32>, vector<64x128xf32>, vector<64x128xf32> -> vector<64x128xf32>
    %c0_13 = arith.constant 0 : index
    %c0_14 = arith.constant 0 : index
    %18 = vector.load %arg9[%c0_13, %c0_14] : memref<64x1xf32, #tpu.memory_space<vmem>>, vector<64x1xf32>
    %19 = vector.broadcast %18 : vector<64x1xf32> to vector<64x128xf32>
    %20 = arith.addf %17, %19 : vector<64x128xf32>
    %21 = vector.extract_strided_slice %20 {offsets = [0, 0], sizes = [32, 128], strides = [1, 1]} : vector<64x128xf32> to vector<32x128xf32>
    %22 = math.tanh %21 : vector<32x128xf32>
    %23 = vector.extract_strided_slice %20 {offsets = [32, 0], sizes = [32, 128], strides = [1, 1]} : vector<64x128xf32> to vector<32x128xf32>
    %cst_15 = arith.constant 0.000000e+00 : f32
    %24 = vector.broadcast %cst_15 : f32 to vector<32x128xf32>
    %25 = arith.maximumf %23, %24 : vector<32x128xf32>
    %26 = tpu.concatenate %22, %25 in 0 : vector<32x128xf32>, vector<32x128xf32> -> vector<64x128xf32>
    %c0_16 = arith.constant 0 : index
    %c0_17 = arith.constant 0 : index
    %27 = vector.load %arg6[%c0_16, %c0_17] : memref<64x64xf32, #tpu.memory_space<vmem>>, vector<64x64xf32>
    %cst_18 = arith.constant dense<0.000000e+00> : vector<64x128xf32>
    %28 = tpu.matmul %27, %26, %cst_18 {dimension_numbers = #tpu.dot_dimension_numbers<[1], [0], [0], [1], [0, 0, 1, 1], [], []>} : vector<64x64xf32>, vector<64x128xf32>, vector<64x128xf32> -> vector<64x128xf32>
    %c0_19 = arith.constant 0 : index
    %c0_20 = arith.constant 0 : index
    %29 = vector.load %arg10[%c0_19, %c0_20] : memref<64x1xf32, #tpu.memory_space<vmem>>, vector<64x1xf32>
    %30 = vector.broadcast %29 : vector<64x1xf32> to vector<64x128xf32>
    %31 = arith.addf %28, %30 : vector<64x128xf32>
    %32 = vector.extract_strided_slice %31 {offsets = [0, 0], sizes = [32, 128], strides = [1, 1]} : vector<64x128xf32> to vector<32x128xf32>
    %33 = math.tanh %32 : vector<32x128xf32>
    %34 = vector.extract_strided_slice %31 {offsets = [32, 0], sizes = [32, 128], strides = [1, 1]} : vector<64x128xf32> to vector<32x128xf32>
    %cst_21 = arith.constant 0.000000e+00 : f32
    %35 = vector.broadcast %cst_21 : f32 to vector<32x128xf32>
    %36 = arith.maximumf %34, %35 : vector<32x128xf32>
    %37 = tpu.concatenate %33, %36 in 0 : vector<32x128xf32>, vector<32x128xf32> -> vector<64x128xf32>
    %c0_22 = arith.constant 0 : index
    %c0_23 = arith.constant 0 : index
    %38 = vector.load %arg7[%c0_22, %c0_23] : memref<32x64xf32, #tpu.memory_space<vmem>>, vector<32x64xf32>
    %cst_24 = arith.constant dense<0.000000e+00> : vector<32x128xf32>
    %39 = tpu.matmul %38, %37, %cst_24 {dimension_numbers = #tpu.dot_dimension_numbers<[1], [0], [0], [1], [0, 0, 1, 1], [], []>} : vector<32x64xf32>, vector<64x128xf32>, vector<32x128xf32> -> vector<32x128xf32>
    %c0_25 = arith.constant 0 : index
    %c0_26 = arith.constant 0 : index
    %40 = vector.load %arg11[%c0_25, %c0_26] : memref<32x1xf32, #tpu.memory_space<vmem>>, vector<32x1xf32>
    %41 = vector.broadcast %40 : vector<32x1xf32> to vector<32x128xf32>
    %42 = arith.addf %39, %41 : vector<32x128xf32>
    %43 = vector.extract_strided_slice %42 {offsets = [0, 0], sizes = [16, 128], strides = [1, 1]} : vector<32x128xf32> to vector<16x128xf32>
    %44 = vector.extract_strided_slice %42 {offsets = [16, 0], sizes = [16, 128], strides = [1, 1]} : vector<32x128xf32> to vector<16x128xf32>
    %45 = arith.subf %0, %44 : vector<16x128xf32>
    %46 = vector.broadcast %2 : vector<16x1xf32> to vector<16x128xf32>
    %47 = arith.mulf %46, %45 : vector<16x128xf32>
    %cst_27 = arith.constant 0.000000e+00 : f32
    %48 = vector.broadcast %cst_27 : f32 to vector<16x128xf32>
    %49 = arith.subf %48, %43 : vector<16x128xf32>
    %50 = math.exp %49 : vector<16x128xf32>
    %51 = arith.mulf %47, %50 : vector<16x128xf32>
    %52 = arith.addf %4, %51 : vector<16x128xf32>
    %cst_28 = arith.constant 0.000000e+00 : f32
    %53 = vector.broadcast %cst_28 : f32 to vector<16x1xf32>
    %54 = arith.subf %53, %2 : vector<16x1xf32>
    %55 = vector.broadcast %54 : vector<16x1xf32> to vector<16x128xf32>
    %56 = arith.mulf %55, %43 : vector<16x128xf32>
    %c0_29 = arith.constant 0 : index
    %c0_30 = arith.constant 0 : index
    %57 = vector.load %arg12[%c0_29, %c0_30] : memref<32x128xf32, #tpu.memory_space<vmem>>, vector<16x128xf32>
    tpu.vector_store %arg12[%c0_29, %c0_30], %52 {strides = array<i32>} : memref<32x128xf32, #tpu.memory_space<vmem>>, vector<16x128xf32>,
    %c16 = arith.constant 16 : index
    %c0_31 = arith.constant 0 : index
    %58 = vector.load %arg12[%c16, %c0_31] : memref<32x128xf32, #tpu.memory_space<vmem>>, vector<16x128xf32>
    tpu.vector_store %arg12[%c16, %c0_31], %56 {strides = array<i32>} : memref<32x128xf32, #tpu.memory_space<vmem>>, vector<16x128xf32>,
    return
  }
  func.func @transform_0(%arg0: i32) -> (i32, i32) {
    %c0_i32 = arith.constant 0 : i32
    %c0_i32_0 = arith.constant 0 : i32
    return %c0_i32, %arg0 : i32, i32
  }
  func.func @transform_1(%arg0: i32) -> (i32, i32) {
    %c0_i32 = arith.constant 0 : i32
    %c0_i32_0 = arith.constant 0 : i32
    %c0_i32_1 = arith.constant 0 : i32
    return %c0_i32, %c0_i32_0 : i32, i32
  }
  func.func @transform_2(%arg0: i32) -> (i32, i32) {
    %c0_i32 = arith.constant 0 : i32
    %c0_i32_0 = arith.constant 0 : i32
    %c0_i32_1 = arith.constant 0 : i32
    return %c0_i32, %c0_i32_0 : i32, i32
  }
  func.func @transform_3(%arg0: i32) -> (i32, i32) {
    %c0_i32 = arith.constant 0 : i32
    %c0_i32_0 = arith.constant 0 : i32
    %c0_i32_1 = arith.constant 0 : i32
    return %c0_i32, %c0_i32_0 : i32, i32
  }
  func.func @transform_4(%arg0: i32) -> (i32, i32) {
    %c0_i32 = arith.constant 0 : i32
    %c0_i32_0 = arith.constant 0 : i32
    %c0_i32_1 = arith.constant 0 : i32
    return %c0_i32, %c0_i32_0 : i32, i32
  }
  func.func @transform_5(%arg0: i32) -> (i32, i32) {
    %c0_i32 = arith.constant 0 : i32
    %c0_i32_0 = arith.constant 0 : i32
    %c0_i32_1 = arith.constant 0 : i32
    return %c0_i32, %c0_i32_0 : i32, i32
  }
  func.func @transform_6(%arg0: i32) -> (i32, i32) {
    %c0_i32 = arith.constant 0 : i32
    %c0_i32_0 = arith.constant 0 : i32
    %c0_i32_1 = arith.constant 0 : i32
    return %c0_i32, %c0_i32_0 : i32, i32
  }
  func.func @transform_7(%arg0: i32) -> (i32, i32) {
    %c0_i32 = arith.constant 0 : i32
    %c0_i32_0 = arith.constant 0 : i32
    %c0_i32_1 = arith.constant 0 : i32
    return %c0_i32, %c0_i32_0 : i32, i32
  }
  func.func @transform_8(%arg0: i32) -> (i32, i32) {
    %c0_i32 = arith.constant 0 : i32
    %c0_i32_0 = arith.constant 0 : i32
    %c0_i32_1 = arith.constant 0 : i32
    return %c0_i32, %c0_i32_0 : i32, i32
  }
  func.func @transform_9(%arg0: i32) -> (i32, i32) {
    %c0_i32 = arith.constant 0 : i32
    %c0_i32_0 = arith.constant 0 : i32
    %c0_i32_1 = arith.constant 0 : i32
    return %c0_i32, %c0_i32_0 : i32, i32
  }
  func.func @transform_10(%arg0: i32) -> (i32, i32) {
    %c0_i32 = arith.constant 0 : i32
    %c0_i32_0 = arith.constant 0 : i32
    %c0_i32_1 = arith.constant 0 : i32
    return %c0_i32, %c0_i32_0 : i32, i32
  }
  func.func @transform_11(%arg0: i32) -> (i32, i32) {
    %c0_i32 = arith.constant 0 : i32
    %c0_i32_0 = arith.constant 0 : i32
    return %c0_i32, %arg0 : i32, i32
  }
}

</mosaic_0001>

<llo_original>
// kernel: tpu_custom_call.1
$region0: #{tpu_custom_call.1}
  #allocation0 [shape = 'u32[]', space=smem, size = 0x4, offset = 0x4, fixed_abs, tag = 'smem constant byte address 0x4 - core index']
  #allocation1 [shape = 'u32[144,128]{1,0:T(1,128)}', space=vmem, size = 0x12000, scoped, tag = 'internal scratch']
  %s0 = inlined_call_operand.vmem [shape: f32[16,256], index: 0, kind: input, shape index: {}]
  %s1 = inlined_call_operand.vmem [shape: f32[16,1], index: 1, kind: input, shape index: {}]
  %s2 = inlined_call_operand.vmem [shape: f32[16,1], index: 2, kind: input, shape index: {}]
  %s3 = inlined_call_operand.vmem [shape: f32[64,16], index: 3, kind: input, shape index: {}]
  %s4 = inlined_call_operand.vmem [shape: f32[64,64], index: 4, kind: input, shape index: {}]
  %s5 = inlined_call_operand.vmem [shape: f32[64,64], index: 5, kind: input, shape index: {}]
  %s6 = inlined_call_operand.vmem [shape: f32[32,64], index: 6, kind: input, shape index: {}]
  %s7 = inlined_call_operand.vmem [shape: f32[64,1], index: 7, kind: input, shape index: {}]
  %s8 = inlined_call_operand.vmem [shape: f32[64,1], index: 8, kind: input, shape index: {}]
  %s9 = inlined_call_operand.vmem [shape: f32[64,1], index: 9, kind: input, shape index: {}]
  %s10 = inlined_call_operand.vmem [shape: f32[32,1], index: 10, kind: input, shape index: {}]
  %s11 = inlined_call_operand.hbm [shape: f32[32,256], index: 11, kind: output, shape index: {}]
  %s12 = sld [smem:[#allocation0]]
  $region115: #{tpu_custom_call.1} parent=0
    _
  %s14 = ssub.s32 1, %s12
  %s15 = scalar_select 0, %s14, %s12
  $region1: #{tpu_custom_call.1} parent=0
    #allocation2 [shape = 'u8[16384]{0}', space=vmem, size = 0x4000, scoped, tag = 'input window, operand 0']
    #allocation3 [shape = 'u8[32768]{0}', space=vmem, size = 0x8000, scoped, tag = 'output window, operand 0']
    #allocation4 [shape = 's32[2]{0}', space=sflag, size = 0x8, scoped, tag = 'scoped memory for tpu_custom_call.1']
    %16 = vsyncpa [#allocation4], 0
    %s17 = scalar_lea.sflag [#allocation4], 1
    %18 = vsyncpa %s17, 0
    loop: start=0, step=1, limit=4
    $region2: #{tpu_custom_call.1} parent=1 // loop_pre_header
      _
    $region3: #{tpu_custom_call.1} parent=1 // loop_header
      %s20 = sphi 0, %s24
      %p21 = scmp.ge.s32.totalorder %s20, 4
      %s30 = sphi 0, %s32
      %s33 = sphi 0, %s30
      %s34 = sphi 0, %s33
      %s50 = sphi 0, %s34
      %s54 = sphi 0, %s54
      %s56 = sphi 0, %s54
      %s57 = sphi 0, %s56
      %s71 = sphi 0, %s57
      %s75 = sphi 0, %s75
      %s77 = sphi 0, %s75
      %s78 = sphi 0, %s77
      %s92 = sphi 0, %s78
      %s96 = sphi 0, %s96
      %s98 = sphi 0, %s96
      %s99 = sphi 0, %s98
      %s113 = sphi 0, %s99
      %s117 = sphi 0, %s117
      %s119 = sphi 0, %s117
      %s120 = sphi 0, %s119
      %s134 = sphi 0, %s120
      %s138 = sphi 0, %s138
      %s140 = sphi 0, %s138
      %s141 = sphi 0, %s140
      %s155 = sphi 0, %s141
      %s159 = sphi 0, %s159
      %s161 = sphi 0, %s159
      %s162 = sphi 0, %s161
      %s176 = sphi 0, %s162
      %s180 = sphi 0, %s180
      %s182 = sphi 0, %s180
      %s183 = sphi 0, %s182
      %s197 = sphi 0, %s183
      %s201 = sphi 0, %s201
      %s203 = sphi 0, %s201
      %s204 = sphi 0, %s203
      %s218 = sphi 0, %s204
      %s222 = sphi 0, %s222
      %s224 = sphi 0, %s222
      %s225 = sphi 0, %s224
      %s239 = sphi 0, %s225
      %s243 = sphi 0, %s243
      %s245 = sphi 0, %s243
      %s246 = sphi 0, %s245
      %s260 = sphi 0, %s246
      %s266 = sphi 0, %s268
      %s269 = sphi 0, %s266
      %s270 = sphi 0, %s269
      %s286 = sphi 0, %s270
    $region4: #{tpu_custom_call.1} parent=1 // loop_header_branch
      %23 = sbr.rel (%p21) target = $region8
    $region5: #{tpu_custom_call.1} parent=1 // loop_body
      %s25 = ssub.s32 %s20, 1
      %s26 = ssub.s32 %s20, 2
      %s27 = sadd.s32 %s20, 1
      %s28 = ssub.s32 %s20, %s27
      %p29 = scmp.eq.s32.totalorder %s28, 0
      %s31 = sadd.s32 %s30, 1
      %s32 = scalar_select %p29, %s30, %s31
      %p35 = pneg %p29
      %p36 = scmp.eq.s32.totalorder %s20, 1
      %p37 = por %p35, %p36
      %p38 = scmp.ne.s32.totalorder %s30, %s33
      %p39 = scmp.eq.s32.totalorder %s20, 0
      %p40 = por %p38, %p39
      %p41 = scmp.ne.s32.totalorder %s30, %s33
      %p42 = scmp.eq.s32.totalorder %s25, 1
      %p43 = por %p41, %p42
      %p44 = scmp.ne.s32.totalorder %s33, %s34
      %p45 = scmp.eq.s32.totalorder %s25, 0
      %p46 = por %p44, %p45
      %p47 = scmp.ne.s32.totalorder %s33, %s34
      %p48 = scmp.eq.s32.totalorder %s26, 1
      %p49 = por %p47, %p48
      %p51 = scmp.ne.s32.totalorder %s34, %s50
      %p52 = scmp.eq.s32.totalorder %s26, 0
      %p53 = por %p51, %p52
      %s55 = sadd.s32 %s54, 1
      %p58 = scmp.eq.s32.totalorder %s20, 1
      %p59 = scmp.ne.s32.totalorder %s54, %s56
      %p60 = scmp.eq.s32.totalorder %s20, 0
      %p61 = por %p59, %p60
      %p62 = scmp.ne.s32.totalorder %s54, %s56
      %p63 = scmp.eq.s32.totalorder %s25, 1
      %p64 = por %p62, %p63
      %p65 = scmp.ne.s32.totalorder %s56, %s57
      %p66 = scmp.eq.s32.totalorder %s25, 0
      %p67 = por %p65, %p66
      %p68 = scmp.ne.s32.totalorder %s56, %s57
      %p69 = scmp.eq.s32.totalorder %s26, 1
      %p70 = por %p68, %p69
      %p72 = scmp.ne.s32.totalorder %s57, %s71
      %p73 = scmp.eq.s32.totalorder %s26, 0
      %p74 = por %p72, %p73
      %s76 = sadd.s32 %s75, 1
      %p79 = scmp.eq.s32.totalorder %s20, 1
      %p80 = scmp.ne.s32.totalorder %s75, %s77
      %p81 = scmp.eq.s32.totalorder %s20, 0
      %p82 = por %p80, %p81
      %p83 = scmp.ne.s32.totalorder %s75, %s77
      %p84 = scmp.eq.s32.totalorder %s25, 1
      %p85 = por %p83, %p84
      %p86 = scmp.ne.s32.totalorder %s77, %s78
      %p87 = scmp.eq.s32.totalorder %s25, 0
      %p88 = por %p86, %p87
      %p89 = scmp.ne.s32.totalorder %s77, %s78
      %p90 = scmp.eq.s32.totalorder %s26, 1
      %p91 = por %p89, %p90
      %p93 = scmp.ne.s32.totalorder %s78, %s92
      %p94 = scmp.eq.s32.totalorder %s26, 0
      %p95 = por %p93, %p94
      %s97 = sadd.s32 %s96, 1
      %p100 = scmp.eq.s32.totalorder %s20, 1
      %p101 = scmp.ne.s32.totalorder %s96, %s98
      %p102 = scmp.eq.s32.totalorder %s20, 0
      %p103 = por %p101, %p102
      %p104 = scmp.ne.s32.totalorder %s96, %s98
      %p105 = scmp.eq.s32.totalorder %s25, 1
      %p106 = por %p104, %p105
      %p107 = scmp.ne.s32.totalorder %s98, %s99
      %p108 = scmp.eq.s32.totalorder %s25, 0
      %p109 = por %p107, %p108
      %p110 = scmp.ne.s32.totalorder %s98, %s99
      %p111 = scmp.eq.s32.totalorder %s26, 1
      %p112 = por %p110, %p111
      %p114 = scmp.ne.s32.totalorder %s99, %s113
      %p115 = scmp.eq.s32.totalorder %s26, 0
      %p116 = por %p114, %p115
      %s118 = sadd.s32 %s117, 1
      %p121 = scmp.eq.s32.totalorder %s20, 1
      %p122 = scmp.ne.s32.totalorder %s117, %s119
      %p123 = scmp.eq.s32.totalorder %s20, 0
      %p124 = por %p122, %p123
      %p125 = scmp.ne.s32.totalorder %s117, %s119
      %p126 = scmp.eq.s32.totalorder %s25, 1
      %p127 = por %p125, %p126
      %p128 = scmp.ne.s32.totalorder %s119, %s120
      %p129 = scmp.eq.s32.totalorder %s25, 0
      %p130 = por %p128, %p129
      %p131 = scmp.ne.s32.totalorder %s119, %s120
      %p132 = scmp.eq.s32.totalorder %s26, 1
      %p133 = por %p131, %p132
      %p135 = scmp.ne.s32.totalorder %s120, %s134
      %p136 = scmp.eq.s32.totalorder %s26, 0
      %p137 = por %p135, %p136
      %s139 = sadd.s32 %s138, 1
      %p142 = scmp.eq.s32.totalorder %s20, 1
      %p143 = scmp.ne.s32.totalorder %s138, %s140
      %p144 = scmp.eq.s32.totalorder %s20, 0
      %p145 = por %p143, %p144
      %p146 = scmp.ne.s32.totalorder %s138, %s140
      %p147 = scmp.eq.s32.totalorder %s25, 1
      %p148 = por %p146, %p147
      %p149 = scmp.ne.s32.totalorder %s140, %s141
      %p150 = scmp.eq.s32.totalorder %s25, 0
      %p151 = por %p149, %p150
      %p152 = scmp.ne.s32.totalorder %s140, %s141
      %p153 = scmp.eq.s32.totalorder %s26, 1
      %p154 = por %p152, %p153
      %p156 = scmp.ne.s32.totalorder %s141, %s155
      %p157 = scmp.eq.s32.totalorder %s26, 0
      %p158 = por %p156, %p157
      %s160 = sadd.s32 %s159, 1
      %p163 = scmp.eq.s32.totalorder %s20, 1
      %p164 = scmp.ne.s32.totalorder %s159, %s161
      %p165 = scmp.eq.s32.totalorder %s20, 0
      %p166 = por %p164, %p165
      %p167 = scmp.ne.s32.totalorder %s159, %s161
      %p168 = scmp.eq.s32.totalorder %s25, 1
      %p169 = por %p167, %p168
      %p170 = scmp.ne.s32.totalorder %s161, %s162
      %p171 = scmp.eq.s32.totalorder %s25, 0
      %p172 = por %p170, %p171
      %p173 = scmp.ne.s32.totalorder %s161, %s162
      %p174 = scmp.eq.s32.totalorder %s26, 1
      %p175 = por %p173, %p174
      %p177 = scmp.ne.s32.totalorder %s162, %s176
      %p178 = scmp.eq.s32.totalorder %s26, 0
      %p179 = por %p177, %p178
      %s181 = sadd.s32 %s180, 1
      %p184 = scmp.eq.s32.totalorder %s20, 1
      %p185 = scmp.ne.s32.totalorder %s180, %s182
      %p186 = scmp.eq.s32.totalorder %s20, 0
      %p187 = por %p185, %p186
      %p188 = scmp.ne.s32.totalorder %s180, %s182
      %p189 = scmp.eq.s32.totalorder %s25, 1
      %p190 = por %p188, %p189
      %p191 = scmp.ne.s32.totalorder %s182, %s183
      %p192 = scmp.eq.s32.totalorder %s25, 0
      %p193 = por %p191, %p192
      %p194 = scmp.ne.s32.totalorder %s182, %s183
      %p195 = scmp.eq.s32.totalorder %s26, 1
      %p196 = por %p194, %p195
      %p198 = scmp.ne.s32.totalorder %s183, %s197
      %p199 = scmp.eq.s32.totalorder %s26, 0
      %p200 = por %p198, %p199
      %s202 = sadd.s32 %s201, 1
      %p205 = scmp.eq.s32.totalorder %s20, 1
      %p206 = scmp.ne.s32.totalorder %s201, %s203
      %p207 = scmp.eq.s32.totalorder %s20, 0
      %p208 = por %p206, %p207
      %p209 = scmp.ne.s32.totalorder %s201, %s203
      %p210 = scmp.eq.s32.totalorder %s25, 1
      %p211 = por %p209, %p210
      %p212 = scmp.ne.s32.totalorder %s203, %s204
      %p213 = scmp.eq.s32.totalorder %s25, 0
      %p214 = por %p212, %p213
      %p215 = scmp.ne.s32.totalorder %s203, %s204
      %p216 = scmp.eq.s32.totalorder %s26, 1
      %p217 = por %p215, %p216
      %p219 = scmp.ne.s32.totalorder %s204, %s218
      %p220 = scmp.eq.s32.totalorder %s26, 0
      %p221 = por %p219, %p220
      %s223 = sadd.s32 %s222, 1
      %p226 = scmp.eq.s32.totalorder %s20, 1
      %p227 = scmp.ne.s32.totalorder %s222, %s224
      %p228 = scmp.eq.s32.totalorder %s20, 0
      %p229 = por %p227, %p228
      %p230 = scmp.ne.s32.totalorder %s222, %s224
      %p231 = scmp.eq.s32.totalorder %s25, 1
      %p232 = por %p230, %p231
      %p233 = scmp.ne.s32.totalorder %s224, %s225
      %p234 = scmp.eq.s32.totalorder %s25, 0
      %p235 = por %p233, %p234
      %p236 = scmp.ne.s32.totalorder %s224, %s225
      %p237 = scmp.eq.s32.totalorder %s26, 1
      %p238 = por %p236, %p237
      %p240 = scmp.ne.s32.totalorder %s225, %s239
      %p241 = scmp.eq.s32.totalorder %s26, 0
      %p242 = por %p240, %p241
      %s244 = sadd.s32 %s243, 1
      %p247 = scmp.eq.s32.totalorder %s20, 1
      %p248 = scmp.ne.s32.totalorder %s243, %s245
      %p249 = scmp.eq.s32.totalorder %s20, 0
      %p250 = por %p248, %p249
      %p251 = scmp.ne.s32.totalorder %s243, %s245
      %p252 = scmp.eq.s32.totalorder %s25, 1
      %p253 = por %p251, %p252
      %p254 = scmp.ne.s32.totalorder %s245, %s246
      %p255 = scmp.eq.s32.totalorder %s25, 0
      %p256 = por %p254, %p255
      %p257 = scmp.ne.s32.totalorder %s245, %s246
      %p258 = scmp.eq.s32.totalorder %s26, 1
      %p259 = por %p257, %p258
      %p261 = scmp.ne.s32.totalorder %s246, %s260
      %p262 = scmp.eq.s32.totalorder %s26, 0
      %p263 = por %p261, %p262
      %s264 = ssub.s32 %s20, %s27
      %p265 = scmp.eq.s32.totalorder %s264, 0
      %s267 = sadd.s32 %s266, 1
      %s268 = scalar_select %p265, %s266, %s267
      %p271 = pneg %p265
      %p272 = scmp.eq.s32.totalorder %s20, 1
      %p273 = por %p271, %p272
      %p274 = scmp.ne.s32.totalorder %s266, %s269
      %p275 = scmp.eq.s32.totalorder %s20, 0
      %p276 = por %p274, %p275
      %p277 = scmp.ne.s32.totalorder %s266, %s269
      %p278 = scmp.eq.s32.totalorder %s25, 1
      %p279 = por %p277, %p278
      %p280 = scmp.ne.s32.totalorder %s269, %s270
      %p281 = scmp.eq.s32.totalorder %s25, 0
      %p282 = por %p280, %p281
      %p283 = scmp.ne.s32.totalorder %s269, %s270
      %p284 = scmp.eq.s32.totalorder %s26, 1
      %p285 = por %p283, %p284
      %p287 = scmp.ne.s32.totalorder %s270, %s286
      %p288 = scmp.eq.s32.totalorder %s26, 0
      %p289 = por %p287, %p288
      %p290 = scmp.le.s32.totalorder 1, %s20
      %p291 = scmp.lt.s32.totalorder %s20, 3
      %p292 = pnand %p290, %p291
      %p293 = pneg %p292
      // Predicated region
      $region9: #{tpu_custom_call.1} parent=5 // pred_check
        _
      $region10: #{tpu_custom_call.1} parent=5 // pred_check_branch
        %295 = sbr.rel (%p292) target = $region12
      $region11: #{tpu_custom_call.1} parent=5 // pred_region
        %s296 = ssub.s32 %s20, 1
        // Predicated region
        $region13: #{tpu_custom_call.1} parent=11 // pred_check
          %p297 = pneg %p67
        $region14: #{tpu_custom_call.1} parent=11 // pred_check_branch
          %299 = sbr.rel (%p297) target = $region16
        $region15: #{tpu_custom_call.1} parent=11 // pred_region
          _
        $region16: #{tpu_custom_call.1} parent=11 // pred_fallthru
          _
        // Predicated region
        $region17: #{tpu_custom_call.1} parent=11 // pred_check
          %p300 = pneg %p88
        $region18: #{tpu_custom_call.1} parent=11 // pred_check_branch
          %302 = sbr.rel (%p300) target = $region20
        $region19: #{tpu_custom_call.1} parent=11 // pred_region
          _
        $region20: #{tpu_custom_call.1} parent=11 // pred_fallthru
          _
        // Predicated region
        $region21: #{tpu_custom_call.1} parent=11 // pred_check
          %p303 = pneg %p109
        $region22: #{tpu_custom_call.1} parent=11 // pred_check_branch
          %305 = sbr.rel (%p303) target = $region24
        $region23: #{tpu_custom_call.1} parent=11 // pred_region
          _
        $region24: #{tpu_custom_call.1} parent=11 // pred_fallthru
          _
        // Predicated region
        $region25: #{tpu_custom_call.1} parent=11 // pred_check
          %p306 = pneg %p130
        $region26: #{tpu_custom_call.1} parent=11 // pred_check_branch
          %308 = sbr.rel (%p306) target = $region28
        $region27: #{tpu_custom_call.1} parent=11 // pred_region
          _
        $region28: #{tpu_custom_call.1} parent=11 // pred_fallthru
          _
        // Predicated region
        $region29: #{tpu_custom_call.1} parent=11 // pred_check
          %p309 = pneg %p151
        $region30: #{tpu_custom_call.1} parent=11 // pred_check_branch
          %311 = sbr.rel (%p309) target = $region32
        $region31: #{tpu_custom_call.1} parent=11 // pred_region
          _
        $region32: #{tpu_custom_call.1} parent=11 // pred_fallthru
          _
        // Predicated region
        $region33: #{tpu_custom_call.1} parent=11 // pred_check
          %p312 = pneg %p172
        $region34: #{tpu_custom_call.1} parent=11 // pred_check_branch
          %314 = sbr.rel (%p312) target = $region36
        $region35: #{tpu_custom_call.1} parent=11 // pred_region
          _
        $region36: #{tpu_custom_call.1} parent=11 // pred_fallthru
          _
        // Predicated region
        $region37: #{tpu_custom_call.1} parent=11 // pred_check
          %p315 = pneg %p193
        $region38: #{tpu_custom_call.1} parent=11 // pred_check_branch
          %317 = sbr.rel (%p315) target = $region40
        $region39: #{tpu_custom_call.1} parent=11 // pred_region
          _
        $region40: #{tpu_custom_call.1} parent=11 // pred_fallthru
          _
        // Predicated region
        $region41: #{tpu_custom_call.1} parent=11 // pred_check
          %p318 = pneg %p214
        $region42: #{tpu_custom_call.1} parent=11 // pred_check_branch
          %320 = sbr.rel (%p318) target = $region44
        $region43: #{tpu_custom_call.1} parent=11 // pred_region
          _
        $region44: #{tpu_custom_call.1} parent=11 // pred_fallthru
          _
        // Predicated region
        $region45: #{tpu_custom_call.1} parent=11 // pred_check
          %p321 = pneg %p235
        $region46: #{tpu_custom_call.1} parent=11 // pred_check_branch
          %323 = sbr.rel (%p321) target = $region48
        $region47: #{tpu_custom_call.1} parent=11 // pred_region
          _
        $region48: #{tpu_custom_call.1} parent=11 // pred_fallthru
          _
        // Predicated region
        $region49: #{tpu_custom_call.1} parent=11 // pred_check
          %p324 = pneg %p256
        $region50: #{tpu_custom_call.1} parent=11 // pred_check_branch
          %326 = sbr.rel (%p324) target = $region52
        $region51: #{tpu_custom_call.1} parent=11 // pred_region
          _
        $region52: #{tpu_custom_call.1} parent=11 // pred_fallthru
          _
      $region12: #{tpu_custom_call.1} parent=5 // pred_fallthru
        _
      %p327 = scmp.lt.s32.totalorder %s20, 2
      // Predicated region
      $region53: #{tpu_custom_call.1} parent=5 // pred_check
        %p328 = pneg %p327
      $region54: #{tpu_custom_call.1} parent=5 // pred_check_branch
        %330 = sbr.rel (%p328) target = $region56
      $region55: #{tpu_custom_call.1} parent=5 // pred_region
        // Predicated region
        $region57: #{tpu_custom_call.1} parent=55 // pred_check
          %p331 = pneg %p40
        $region58: #{tpu_custom_call.1} parent=55 // pred_check_branch
          %333 = sbr.rel (%p331) target = $region60
        $region59: #{tpu_custom_call.1} parent=55 // pred_region
          %s334 = sand.u32 %s30, 1
          %s335 = sand.u32 %s30, 1
          %s336 = smul.addr %s335, 16
          %s337 = scalar_lea.vmem [#allocation2], %s336
          %s338 = smul.addr %s20, 8
          %s339 = scalar_lea.vmem %s0, %s338
          // Predicated region
          $region61: #{tpu_custom_call.1} parent=59 // pred_check
            _
          $region62: #{tpu_custom_call.1} parent=59 // pred_check_branch
            %341 = sbr.rel (0) target = $region64
          $region63: #{tpu_custom_call.1} parent=59 // pred_region
            // Predicated region
            $region65: #{tpu_custom_call.1} parent=63 // pred_check
              _
            $region66: #{tpu_custom_call.1} parent=63 // pred_check_branch
              %343 = sbr.rel (0) target = $region68
            $region67: #{tpu_custom_call.1} parent=63 // pred_region
              // Predicated region
              $region80: #{tpu_custom_call.1} parent=67 // pred_check
                _
              $region81: #{tpu_custom_call.1} parent=67 // pred_check_branch
                %360 = sbr.rel (0) target = $region83
              $region82: #{tpu_custom_call.1} parent=67 // pred_region
                loop: start=0, step=1, limit=1
                $region84: #{tpu_custom_call.1} parent=82 // loop_pre_header
                  _
                $region85: #{tpu_custom_call.1} parent=82 // loop_header
                  %s362 = sphi 0, %s366
                  %p363 = scmp.ge.s32.totalorder %s362, 1
                  %s367 = sphi %s339, %s339
                  %s368 = sphi %s337, %s337
                $region86: #{tpu_custom_call.1} parent=82 // loop_header_branch
                  %365 = sbr.rel (%p363) target = $region90
                $region87: #{tpu_custom_call.1} parent=82 // loop_body
                  %v369 = vld [vmem:[%s367] sm:$0xff]
                  %370 = vst [vmem:[%s368] sm:$0xff] %v369
                  %v371 = vld [vmem:[%s367 + $0x10] sm:$0xff]
                  %372 = vst [vmem:[%s368 + $0x8] sm:$0xff] %v371
                $region88: #{tpu_custom_call.1} parent=82 // loop_footer
                  %s366 = sadd.s32 1, %s362
                $region89: #{tpu_custom_call.1} parent=82 // loop_footer_branch
                  %361 = sbr.rel target = $region85
                $region90: #{tpu_custom_call.1} parent=82 // loop_exit
                  _
              $region83: #{tpu_custom_call.1} parent=67 // pred_fallthru
                _
              // Predicated region
              $region91: #{tpu_custom_call.1} parent=67 // pred_check
                _
              $region92: #{tpu_custom_call.1} parent=67 // pred_check_branch
                %374 = sbr.rel target = $region94
              $region93: #{tpu_custom_call.1} parent=67 // pred_region
                _
              $region94: #{tpu_custom_call.1} parent=67 // pred_fallthru
                _
            $region68: #{tpu_custom_call.1} parent=63 // pred_fallthru
              _
            // Predicated region
            $region69: #{tpu_custom_call.1} parent=63 // pred_check
              _
            $region70: #{tpu_custom_call.1} parent=63 // pred_check_branch
              %345 = sbr.rel target = $region72
            $region71: #{tpu_custom_call.1} parent=63 // pred_region
              loop: start=0, step=1, limit=1
              $region73: #{tpu_custom_call.1} parent=71 // loop_pre_header
                _
              $region74: #{tpu_custom_call.1} parent=71 // loop_header
                %s348 = sphi 0, %s352
                %p349 = scmp.ge.s32.totalorder %s348, 1
                %s353 = sphi %s339, %s339
                %s354 = sphi %s337, %s337
              $region75: #{tpu_custom_call.1} parent=71 // loop_header_branch
                %351 = sbr.rel (%p349) target = $region79
              $region76: #{tpu_custom_call.1} parent=71 // loop_body
                %v355 = vld [vmem:[%s353] sm:$0xff]
                %356 = vst [vmem:[%s354] sm:$0xff] %v355
                %v357 = vld [vmem:[%s353 + $0x10] sm:$0xff]
                %358 = vst [vmem:[%s354 + $0x8] sm:$0xff] %v357
              $region77: #{tpu_custom_call.1} parent=71 // loop_footer
                %s352 = sadd.s32 1, %s348
              $region78: #{tpu_custom_call.1} parent=71 // loop_footer_branch
                %347 = sbr.rel target = $region74
              $region79: #{tpu_custom_call.1} parent=71 // loop_exit
                _
            $region72: #{tpu_custom_call.1} parent=63 // pred_fallthru
              _
          $region64: #{tpu_custom_call.1} parent=59 // pred_fallthru
            _
          %375 = vnop
        $region60: #{tpu_custom_call.1} parent=55 // pred_fallthru
          _
      $region56: #{tpu_custom_call.1} parent=5 // pred_fallthru
        _
      %p376 = scmp.le.s32.totalorder 1, %s20
      %p377 = scmp.lt.s32.totalorder %s20, 3
      %p378 = pnand %p376, %p377
      %p379 = pneg %p378
      // Predicated region
      $region95: #{tpu_custom_call.1} parent=5 // pred_check
        _
      $region96: #{tpu_custom_call.1} parent=5 // pred_check_branch
        %381 = sbr.rel (%p378) target = $region98
      $region97: #{tpu_custom_call.1} parent=5 // pred_region
        %s382 = ssub.s32 %s20, 1
        %s383 = sand.u32 %s33, 1
        %s384 = sand.u32 %s33, 1
        %s385 = smul.addr %s384, 16
        %s386 = scalar_lea.vmem [#allocation2], %s385
        // Predicated region
        $region99: #{tpu_custom_call.1} parent=97 // pred_check
          %p387 = pneg %p46
        $region100: #{tpu_custom_call.1} parent=97 // pred_check_branch
          %389 = sbr.rel (%p387) target = $region102
        $region101: #{tpu_custom_call.1} parent=97 // pred_region
          _
        $region102: #{tpu_custom_call.1} parent=97 // pred_fallthru
          _
        %s390 = sand.u32 %s33, 1
        %s391 = sand.u32 %s33, 1
        %s392 = smul.addr %s391, 16
        %s393 = scalar_lea.vmem [#allocation2], %s392
        %p394 = pneg %p46
        %p395 = pneg %p43
        %p396 = pneg %p67
        %p397 = pneg %p64
        %p398 = pneg %p88
        %p399 = pneg %p85
        %p400 = pneg %p109
        %p401 = pneg %p106
        %p402 = pneg %p130
        %p403 = pneg %p127
        %p404 = pneg %p151
        %p405 = pneg %p148
        %p406 = pneg %p172
        %p407 = pneg %p169
        %p408 = pneg %p193
        %p409 = pneg %p190
        %p410 = pneg %p214
        %p411 = pneg %p211
        %p412 = pneg %p235
        %p413 = pneg %p232
        %p414 = pneg %p256
        %p415 = pneg %p253
        %p416 = pneg %p282
        %p417 = pneg %p279
        %s418 = sand.u32 %s269, 1
        %s419 = scalar_lea.sflag [#allocation4], %s418
        %s420 = sand.u32 %s269, 1
        %s421 = smul.addr %s420, 32
        %s422 = scalar_lea.vmem [#allocation3], %s421
        %v423 = vld [vmem:[%s386] sm:$0xff]
        %v424 = vld [vmem:[%s386 + $0x8] sm:$0xff]
        %v425 = vld [vmem:[%s1] sm:$0xff]
        %v426 = vld [vmem:[%s1 + $0x8] sm:$0xff]
        %v427 = vld [vmem:[%s2] sm:$0xff]
        %v428 = vld [vmem:[%s2 + $0x8] sm:$0xff]
        %430 = vset.pattern.permute.xlu0 0
        %431 = vperm.xlu0 %430, %v425
        %v432 = vpop.permute.xlu0 %431
        %435 = vset.pattern.permute.xlu0 0
        %436 = vperm.xlu0 %435, %v426
        %v437 = vpop.permute.xlu0 %436
        %v439 = vmul.f32 %v423, %v432
        %v440 = vmul.f32 %v424, %v437
        %v441 = vld [vmem:[%s3] sm:$0xff]
        %v442 = vld [vmem:[%s3 + $0x8] sm:$0xff]
        %v443 = vld [vmem:[%s3 + $0x10] sm:$0xff]
        %v444 = vld [vmem:[%s3 + $0x18] sm:$0xff]
        %v445 = vld [vmem:[%s3 + $0x20] sm:$0xff]
        %v446 = vld [vmem:[%s3 + $0x28] sm:$0xff]
        %v447 = vld [vmem:[%s3 + $0x30] sm:$0xff]
        %v448 = vld [vmem:[%s3 + $0x38] sm:$0xff]
        %v449 = vld [vmem:[%s7] sm:$0xff]
        %v450 = vld [vmem:[%s7 + $0x8] sm:$0xff]
        %v451 = vld [vmem:[%s7 + $0x10] sm:$0xff]
        %v452 = vld [vmem:[%s7 + $0x18] sm:$0xff]
        %v453 = vld [vmem:[%s7 + $0x20] sm:$0xff]
        %v454 = vld [vmem:[%s7 + $0x28] sm:$0xff]
        %v455 = vld [vmem:[%s7 + $0x30] sm:$0xff]
        %v456 = vld [vmem:[%s7 + $0x38] sm:$0xff]
        %458 = vset.pattern.permute.xlu0 0
        %459 = vperm.xlu0 %458, %v449
        %v460 = vpop.permute.xlu0 %459
        %463 = vset.pattern.permute.xlu0 0
        %464 = vperm.xlu0 %463, %v450
        %v465 = vpop.permute.xlu0 %464
        %468 = vset.pattern.permute.xlu0 0
        %469 = vperm.xlu0 %468, %v451
        %v470 = vpop.permute.xlu0 %469
        %473 = vset.pattern.permute.xlu0 0
        %474 = vperm.xlu0 %473, %v452
        %v475 = vpop.permute.xlu0 %474
        %478 = vset.pattern.permute.xlu0 0
        %479 = vperm.xlu0 %478, %v453
        %v480 = vpop.permute.xlu0 %479
        %483 = vset.pattern.permute.xlu0 0
        %484 = vperm.xlu0 %483, %v454
        %v485 = vpop.permute.xlu0 %484
        %488 = vset.pattern.permute.xlu0 0
        %489 = vperm.xlu0 %488, %v455
        %v490 = vpop.permute.xlu0 %489
        %493 = vset.pattern.permute.xlu0 0
        %494 = vperm.xlu0 %493, %v456
        %v495 = vpop.permute.xlu0 %494
        %vm497 = vcmask 130048
        %v499 = vsel %vm497, %v441, 0
        %v502 = vsel %vm497, %v442, 0
        %v505 = vsel %vm497, %v443, 0
        %v508 = vsel %vm497, %v444, 0
        %v511 = vsel %vm497, %v445, 0
        %v514 = vsel %vm497, %v446, 0
        %v517 = vsel %vm497, %v447, 0
        %v520 = vsel %vm497, %v448, 0
        %522 = vmatprep.subr.mxu0 0.0
        %523 = vmatpush1.msra.mxu0 %v439
        %524 = vmatprep.subr.mxu0 0.0
        %525 = vmatpush1.msra.mxu0 %v440
        %526 = vmatprep.subr.mxu0 0.0
        %527 = vmatpush1.msra.mxu0 0.0
        %528 = vmatprep.subr.mxu0 0.0
        %529 = vmatpush1.msra.mxu0 0.0
        %530 = vmatprep.subr.mxu0 0.0
        %531 = vmatpush1.msra.mxu0 0.0
        %532 = vmatprep.subr.mxu0 0.0
        %533 = vmatpush1.msra.mxu0 0.0
        %534 = vmatprep.subr.mxu0 0.0
        %535 = vmatpush1.msra.mxu0 0.0
        %536 = vmatprep.subr.mxu0 0.0
        %537 = vmatpush1.msra.mxu0 0.0
        %538 = vmatprep.subr.mxu0 0.0
        %539 = vmatpush1.msra.mxu0 0.0
        %540 = vmatprep.subr.mxu0 0.0
        %541 = vmatpush1.msra.mxu0 0.0
        %542 = vmatprep.subr.mxu0 0.0
        %543 = vmatpush1.msra.mxu0 0.0
        %544 = vmatprep.subr.mxu0 0.0
        %545 = vmatpush1.msra.mxu0 0.0
        %546 = vmatprep.subr.mxu0 0.0
        %547 = vmatpush1.msra.mxu0 0.0
        %548 = vmatprep.subr.mxu0 0.0
        %549 = vmatpush1.msra.mxu0 0.0
        %550 = vmatprep.subr.mxu0 0.0
        %551 = vmatpush1.msra.mxu0 0.0
        %552 = vmatprep.subr.mxu0 0.0
        %553 = vmatpush1.msra.mxu0 0.0
        %554 = vmatprep.subr.mxu0 0.0
        %555 = vmatpush1.msra.mxu0 0.0
        %556 = vmatprep.subr.mxu0 0.0
        %557 = vmatpush1.msra.mxu0 0.0
        %558 = vmatprep.subr.mxu0 0.0
        %559 = vmatpush1.msra.mxu0 0.0
        %560 = vmatprep.subr.mxu0 0.0
        %561 = vmatpush1.msra.mxu0 0.0
        %562 = vmatprep.subr.mxu0 0.0
        %563 = vmatpush1.msra.mxu0 0.0
        %564 = vmatprep.subr.mxu0 0.0
        %565 = vmatpush1.msra.mxu0 0.0
        %566 = vmatprep.subr.mxu0 0.0
        %567 = vmatpush1.msra.mxu0 0.0
        %568 = vmatprep.subr.mxu0 0.0
        %569 = vmatpush1.msra.mxu0 0.0
        %570 = vmatprep.subr.mxu0 0.0
        %571 = vmatpush1.msra.mxu0 0.0
        %572 = vmatprep.subr.mxu0 0.0
        %573 = vmatpush1.msra.mxu0 0.0
        %574 = vmatprep.subr.mxu0 0.0
        %575 = vmatpush1.msra.mxu0 0.0
        %576 = vmatprep.subr.mxu0 0.0
        %577 = vmatpush1.msra.mxu0 0.0
        %578 = vmatprep.subr.mxu0 0.0
        %579 = vmatpush1.msra.mxu0 0.0
        %580 = vmatprep.subr.mxu0 0.0
        %581 = vmatpush1.msra.mxu0 0.0
        %582 = vmatprep.subr.mxu0 0.0
        %583 = vmatpush1.msra.mxu0 0.0
        %584 = vmatprep.subr.mxu0 0.0
        %585 = vmatpush1.msra.mxu0 0.0
        %586 = vmatprep.mubr.f32.mxu0 0.0
        %587 = vmatmul.mubr.f32.gmra.mrb[0].mxu0 %v499
        %v588 = vpop.f32.mrb[0].mxu0
        %v589 = vadd.f32 %v460, %v588
        %v590 = vpop.f32.mrb[0].mxu0
        %591 = vmatprep.mubr.f32.mxu0 0.0
        %592 = vmatmul.mubr.f32.gmra.mrb[0].mxu0 %v502
        %v593 = vpop.f32.mrb[0].mxu0
        %v594 = vadd.f32 %v465, %v593
        %v595 = vpop.f32.mrb[0].mxu0
        %596 = vmatprep.mubr.f32.mxu0 0.0
        %597 = vmatmul.mubr.f32.gmra.mrb[0].mxu0 %v505
        %v598 = vpop.f32.mrb[0].mxu0
        %v599 = vadd.f32 %v470, %v598
        %v600 = vpop.f32.mrb[0].mxu0
        %601 = vmatprep.mubr.f32.mxu0 0.0
        %602 = vmatmul.mubr.f32.gmra.mrb[0].mxu0 %v508
        %v603 = vpop.f32.mrb[0].mxu0
        %v604 = vadd.f32 %v475, %v603
        %v605 = vpop.f32.mrb[0].mxu0
        %606 = vmatprep.mubr.f32.mxu0 0.0
        %607 = vmatmul.mubr.f32.gmra.mrb[0].mxu0 %v511
        %v608 = vpop.f32.mrb[0].mxu0
        %v609 = vadd.f32 %v480, %v608
        %v610 = vpop.f32.mrb[0].mxu0
        %611 = vmatprep.mubr.f32.mxu0 0.0
        %612 = vmatmul.mubr.f32.gmra.mrb[0].mxu0 %v514
        %v613 = vpop.f32.mrb[0].mxu0
        %v614 = vadd.f32 %v485, %v613
        %v615 = vpop.f32.mrb[0].mxu0
        %616 = vmatprep.mubr.f32.mxu0 0.0
        %617 = vmatmul.mubr.f32.gmra.mrb[0].mxu0 %v517
        %v618 = vpop.f32.mrb[0].mxu0
        %v619 = vadd.f32 %v490, %v618
        %v620 = vpop.f32.mrb[0].mxu0
        %621 = vmatprep.mubr.f32.mxu0 0.0
        %622 = vmatmul.mubr.f32.gmra.mrb[0].mxu0 %v520
        %v623 = vpop.f32.mrb[0].mxu0
        %v624 = vadd.f32 %v495, %v623
        %v625 = vpop.f32.mrb[0].mxu0
        %626 = vdwg.mxu0
        %v627 = vtanh.pop %v589
        %v628 = vtanh.pop %v594
        %v629 = vtanh.pop %v599
        %v630 = vtanh.pop %v604
        %v631 = vmax.f32 %v609, 0.0
        %v632 = vmax.f32 %v614, 0.0
        %v633 = vmax.f32 %v619, 0.0
        %v634 = vmax.f32 %v624, 0.0
        %v635 = vld [vmem:[%s4] sm:$0xff]
        %v636 = vld [vmem:[%s4 + $0x8] sm:$0xff]
        %v637 = vld [vmem:[%s4 + $0x10] sm:$0xff]
        %v638 = vld [vmem:[%s4 + $0x18] sm:$0xff]
        %v639 = vld [vmem:[%s4 + $0x20] sm:$0xff]
        %v640 = vld [vmem:[%s4 + $0x28] sm:$0xff]
        %v641 = vld [vmem:[%s4 + $0x30] sm:$0xff]
        %v642 = vld [vmem:[%s4 + $0x38] sm:$0xff]
        %v643 = vld [vmem:[%s8] sm:$0xff]
        %v644 = vld [vmem:[%s8 + $0x8] sm:$0xff]
        %v645 = vld [vmem:[%s8 + $0x10] sm:$0xff]
        %v646 = vld [vmem:[%s8 + $0x18] sm:$0xff]
        %v647 = vld [vmem:[%s8 + $0x20] sm:$0xff]
        %v648 = vld [vmem:[%s8 + $0x28] sm:$0xff]
        %v649 = vld [vmem:[%s8 + $0x30] sm:$0xff]
        %v650 = vld [vmem:[%s8 + $0x38] sm:$0xff]
        %652 = vset.pattern.permute.xlu0 0
        %653 = vperm.xlu0 %652, %v643
        %v654 = vpop.permute.xlu0 %653
        %657 = vset.pattern.permute.xlu0 0
        %658 = vperm.xlu0 %657, %v644
        %v659 = vpop.permute.xlu0 %658
        %662 = vset.pattern.permute.xlu0 0
        %663 = vperm.xlu0 %662, %v645
        %v664 = vpop.permute.xlu0 %663
        %667 = vset.pattern.permute.xlu0 0
        %668 = vperm.xlu0 %667, %v646
        %v669 = vpop.permute.xlu0 %668
        %672 = vset.pattern.permute.xlu0 0
        %673 = vperm.xlu0 %672, %v647
        %v674 = vpop.permute.xlu0 %673
        %677 = vset.pattern.permute.xlu0 0
        %678 = vperm.xlu0 %677, %v648
        %v679 = vpop.permute.xlu0 %678
        %682 = vset.pattern.permute.xlu0 0
        %683 = vperm.xlu0 %682, %v649
        %v684 = vpop.permute.xlu0 %683
        %687 = vset.pattern.permute.xlu0 0
        %688 = vperm.xlu0 %687, %v650
        %v689 = vpop.permute.xlu0 %688
        %vm691 = vcmask 523264
        %v693 = vsel %vm691, %v635, 0
        %v696 = vsel %vm691, %v636, 0
        %v699 = vsel %vm691, %v637, 0
        %v702 = vsel %vm691, %v638, 0
        %v705 = vsel %vm691, %v639, 0
        %v708 = vsel %vm691, %v640, 0
        %v711 = vsel %vm691, %v641, 0
        %v714 = vsel %vm691, %v642, 0
        %716 = vmatprep.subr.mxu0 0.0
        %717 = vmatpush1.msra.mxu0 %v627
        %718 = vmatprep.subr.mxu0 0.0
        %719 = vmatpush1.msra.mxu0 %v628
        %720 = vmatprep.subr.mxu0 0.0
        %721 = vmatpush1.msra.mxu0 %v629
        %722 = vmatprep.subr.mxu0 0.0
        %723 = vmatpush1.msra.mxu0 %v630
        %724 = vmatprep.subr.mxu0 0.0
        %725 = vmatpush1.msra.mxu0 %v631
        %726 = vmatprep.subr.mxu0 0.0
        %727 = vmatpush1.msra.mxu0 %v632
        %728 = vmatprep.subr.mxu0 0.0
        %729 = vmatpush1.msra.mxu0 %v633
        %730 = vmatprep.subr.mxu0 0.0
        %731 = vmatpush1.msra.mxu0 %v634
        %732 = vmatprep.subr.mxu0 0.0
        %733 = vmatpush1.msra.mxu0 0.0
        %734 = vmatprep.subr.mxu0 0.0
        %735 = vmatpush1.msra.mxu0 0.0
        %736 = vmatprep.subr.mxu0 0.0
        %737 = vmatpush1.msra.mxu0 0.0
        %738 = vmatprep.subr.mxu0 0.0
        %739 = vmatpush1.msra.mxu0 0.0
        %740 = vmatprep.subr.mxu0 0.0
        %741 = vmatpush1.msra.mxu0 0.0
        %742 = vmatprep.subr.mxu0 0.0
        %743 = vmatpush1.msra.mxu0 0.0
        %744 = vmatprep.subr.mxu0 0.0
        %745 = vmatpush1.msra.mxu0 0.0
        %746 = vmatprep.subr.mxu0 0.0
        %747 = vmatpush1.msra.mxu0 0.0
        %748 = vmatprep.subr.mxu0 0.0
        %749 = vmatpush1.msra.mxu0 0.0
        %750 = vmatprep.subr.mxu0 0.0
        %751 = vmatpush1.msra.mxu0 0.0
        %752 = vmatprep.subr.mxu0 0.0
        %753 = vmatpush1.msra.mxu0 0.0
        %754 = vmatprep.subr.mxu0 0.0
        %755 = vmatpush1.msra.mxu0 0.0
        %756 = vmatprep.subr.mxu0 0.0
        %757 = vmatpush1.msra.mxu0 0.0
        %758 = vmatprep.subr.mxu0 0.0
        %759 = vmatpush1.msra.mxu0 0.0
        %760 = vmatprep.subr.mxu0 0.0
        %761 = vmatpush1.msra.mxu0 0.0
        %762 = vmatprep.subr.mxu0 0.0
        %763 = vmatpush1.msra.mxu0 0.0
        %764 = vmatprep.subr.mxu0 0.0
        %765 = vmatpush1.msra.mxu0 0.0
        %766 = vmatprep.subr.mxu0 0.0
        %767 = vmatpush1.msra.mxu0 0.0
        %768 = vmatprep.subr.mxu0 0.0
        %769 = vmatpush1.msra.mxu0 0.0
        %770 = vmatprep.subr.mxu0 0.0
        %771 = vmatpush1.msra.mxu0 0.0
        %772 = vmatprep.subr.mxu0 0.0
        %773 = vmatpush1.msra.mxu0 0.0
        %774 = vmatprep.subr.mxu0 0.0
        %775 = vmatpush1.msra.mxu0 0.0
        %776 = vmatprep.subr.mxu0 0.0
        %777 = vmatpush1.msra.mxu0 0.0
        %778 = vmatprep.subr.mxu0 0.0
        %779 = vmatpush1.msra.mxu0 0.0
        %780 = vmatprep.mubr.f32.mxu0 0.0
        %781 = vmatmul.mubr.f32.gmra.mrb[0].mxu0 %v693
        %v782 = vpop.f32.mrb[0].mxu0
        %v783 = vadd.f32 %v654, %v782
        %v784 = vpop.f32.mrb[0].mxu0
        %785 = vmatprep.mubr.f32.mxu0 0.0
        %786 = vmatmul.mubr.f32.gmra.mrb[0].mxu0 %v696
        %v787 = vpop.f32.mrb[0].mxu0
        %v788 = vadd.f32 %v659, %v787
        %v789 = vpop.f32.mrb[0].mxu0
        %790 = vmatprep.mubr.f32.mxu0 0.0
        %791 = vmatmul.mubr.f32.gmra.mrb[0].mxu0 %v699
        %v792 = vpop.f32.mrb[0].mxu0
        %v793 = vadd.f32 %v664, %v792
        %v794 = vpop.f32.mrb[0].mxu0
        %795 = vmatprep.mubr.f32.mxu0 0.0
        %796 = vmatmul.mubr.f32.gmra.mrb[0].mxu0 %v702
        %v797 = vpop.f32.mrb[0].mxu0
        %v798 = vadd.f32 %v669, %v797
        %v799 = vpop.f32.mrb[0].mxu0
        %800 = vmatprep.mubr.f32.mxu0 0.0
        %801 = vmatmul.mubr.f32.gmra.mrb[0].mxu0 %v705
        %v802 = vpop.f32.mrb[0].mxu0
        %v803 = vadd.f32 %v674, %v802
        %v804 = vpop.f32.mrb[0].mxu0
        %805 = vmatprep.mubr.f32.mxu0 0.0
        %806 = vmatmul.mubr.f32.gmra.mrb[0].mxu0 %v708
        %v807 = vpop.f32.mrb[0].mxu0
        %v808 = vadd.f32 %v679, %v807
        %v809 = vpop.f32.mrb[0].mxu0
        %810 = vmatprep.mubr.f32.mxu0 0.0
        %811 = vmatmul.mubr.f32.gmra.mrb[0].mxu0 %v711
        %v812 = vpop.f32.mrb[0].mxu0
        %v813 = vadd.f32 %v684, %v812
        %v814 = vpop.f32.mrb[0].mxu0
        %815 = vmatprep.mubr.f32.mxu0 0.0
        %816 = vmatmul.mubr.f32.gmra.mrb[0].mxu0 %v714
        %v817 = vpop.f32.mrb[0].mxu0
        %v818 = vadd.f32 %v689, %v817
        %v819 = vpop.f32.mrb[0].mxu0
        %820 = vdwg.mxu0
        %v821 = vtanh.pop %v783
        %v822 = vtanh.pop %v788
        %v823 = vtanh.pop %v793
        %v824 = vtanh.pop %v798
        %v825 = vmax.f32 %v803, 0.0
        %v826 = vmax.f32 %v808, 0.0
        %v827 = vmax.f32 %v813, 0.0
        %v828 = vmax.f32 %v818, 0.0
        %v829 = vld [vmem:[%s5] sm:$0xff]
        %v830 = vld [vmem:[%s5 + $0x8] sm:$0xff]
        %v831 = vld [vmem:[%s5 + $0x10] sm:$0xff]
        %v832 = vld [vmem:[%s5 + $0x18] sm:$0xff]
        %v833 = vld [vmem:[%s5 + $0x20] sm:$0xff]
        %v834 = vld [vmem:[%s5 + $0x28] sm:$0xff]
        %v835 = vld [vmem:[%s5 + $0x30] sm:$0xff]
        %v836 = vld [vmem:[%s5 + $0x38] sm:$0xff]
        %v837 = vld [vmem:[%s9] sm:$0xff]
        %v838 = vld [vmem:[%s9 + $0x8] sm:$0xff]
        %v839 = vld [vmem:[%s9 + $0x10] sm:$0xff]
        %v840 = vld [vmem:[%s9 + $0x18] sm:$0xff]
        %v841 = vld [vmem:[%s9 + $0x20] sm:$0xff]
        %v842 = vld [vmem:[%s9 + $0x28] sm:$0xff]
        %v843 = vld [vmem:[%s9 + $0x30] sm:$0xff]
        %v844 = vld [vmem:[%s9 + $0x38] sm:$0xff]
        %846 = vset.pattern.permute.xlu0 0
        %847 = vperm.xlu0 %846, %v837
        %v848 = vpop.permute.xlu0 %847
        %851 = vset.pattern.permute.xlu0 0
        %852 = vperm.xlu0 %851, %v838
        %v853 = vpop.permute.xlu0 %852
        %856 = vset.pattern.permute.xlu0 0
        %857 = vperm.xlu0 %856, %v839
        %v858 = vpop.permute.xlu0 %857
        %861 = vset.pattern.permute.xlu0 0
        %862 = vperm.xlu0 %861, %v840
        %v863 = vpop.permute.xlu0 %862
        %866 = vset.pattern.permute.xlu0 0
        %867 = vperm.xlu0 %866, %v841
        %v868 = vpop.permute.xlu0 %867
        %871 = vset.pattern.permute.xlu0 0
        %872 = vperm.xlu0 %871, %v842
        %v873 = vpop.permute.xlu0 %872
        %876 = vset.pattern.permute.xlu0 0
        %877 = vperm.xlu0 %876, %v843
        %v878 = vpop.permute.xlu0 %877
        %881 = vset.pattern.permute.xlu0 0
        %882 = vperm.xlu0 %881, %v844
        %v883 = vpop.permute.xlu0 %882
        %v886 = vsel %vm691, %v829, 0
        %v889 = vsel %vm691, %v830, 0
        %v892 = vsel %vm691, %v831, 0
        %v895 = vsel %vm691, %v832, 0
        %v898 = vsel %vm691, %v833, 0
        %v901 = vsel %vm691, %v834, 0
        %v904 = vsel %vm691, %v835, 0
        %v907 = vsel %vm691, %v836, 0
        %909 = vmatprep.subr.mxu0 0.0
        %910 = vmatpush1.msra.mxu0 %v821
        %911 = vmatprep.subr.mxu0 0.0
        %912 = vmatpush1.msra.mxu0 %v822
        %913 = vmatprep.subr.mxu0 0.0
        %914 = vmatpush1.msra.mxu0 %v823
        %915 = vmatprep.subr.mxu0 0.0
        %916 = vmatpush1.msra.mxu0 %v824
        %917 = vmatprep.subr.mxu0 0.0
        %918 = vmatpush1.msra.mxu0 %v825
        %919 = vmatprep.subr.mxu0 0.0
        %920 = vmatpush1.msra.mxu0 %v826
        %921 = vmatprep.subr.mxu0 0.0
        %922 = vmatpush1.msra.mxu0 %v827
        %923 = vmatprep.subr.mxu0 0.0
        %924 = vmatpush1.msra.mxu0 %v828
        %925 = vmatprep.subr.mxu0 0.0
        %926 = vmatpush1.msra.mxu0 0.0
        %927 = vmatprep.subr.mxu0 0.0
        %928 = vmatpush1.msra.mxu0 0.0
        %929 = vmatprep.subr.mxu0 0.0
        %930 = vmatpush1.msra.mxu0 0.0
        %931 = vmatprep.subr.mxu0 0.0
        %932 = vmatpush1.msra.mxu0 0.0
        %933 = vmatprep.subr.mxu0 0.0
        %934 = vmatpush1.msra.mxu0 0.0
        %935 = vmatprep.subr.mxu0 0.0
        %936 = vmatpush1.msra.mxu0 0.0
        %937 = vmatprep.subr.mxu0 0.0
        %938 = vmatpush1.msra.mxu0 0.0
        %939 = vmatprep.subr.mxu0 0.0
        %940 = vmatpush1.msra.mxu0 0.0
        %941 = vmatprep.subr.mxu0 0.0
        %942 = vmatpush1.msra.mxu0 0.0
        %943 = vmatprep.subr.mxu0 0.0
        %944 = vmatpush1.msra.mxu0 0.0
        %945 = vmatprep.subr.mxu0 0.0
        %946 = vmatpush1.msra.mxu0 0.0
        %947 = vmatprep.subr.mxu0 0.0
        %948 = vmatpush1.msra.mxu0 0.0
        %949 = vmatprep.subr.mxu0 0.0
        %950 = vmatpush1.msra.mxu0 0.0
        %951 = vmatprep.subr.mxu0 0.0
        %952 = vmatpush1.msra.mxu0 0.0
        %953 = vmatprep.subr.mxu0 0.0
        %954 = vmatpush1.msra.mxu0 0.0
        %955 = vmatprep.subr.mxu0 0.0
        %956 = vmatpush1.msra.mxu0 0.0
        %957 = vmatprep.subr.mxu0 0.0
        %958 = vmatpush1.msra.mxu0 0.0
        %959 = vmatprep.subr.mxu0 0.0
        %960 = vmatpush1.msra.mxu0 0.0
        %961 = vmatprep.subr.mxu0 0.0
        %962 = vmatpush1.msra.mxu0 0.0
        %963 = vmatprep.subr.mxu0 0.0
        %964 = vmatpush1.msra.mxu0 0.0
        %965 = vmatprep.subr.mxu0 0.0
        %966 = vmatpush1.msra.mxu0 0.0
        %967 = vmatprep.subr.mxu0 0.0
        %968 = vmatpush1.msra.mxu0 0.0
        %969 = vmatprep.subr.mxu0 0.0
        %970 = vmatpush1.msra.mxu0 0.0
        %971 = vmatprep.subr.mxu0 0.0
        %972 = vmatpush1.msra.mxu0 0.0
        %973 = vmatprep.mubr.f32.mxu0 0.0
        %974 = vmatmul.mubr.f32.gmra.mrb[0].mxu0 %v886
        %v975 = vpop.f32.mrb[0].mxu0
        %v976 = vadd.f32 %v848, %v975
        %v977 = vpop.f32.mrb[0].mxu0
        %978 = vmatprep.mubr.f32.mxu0 0.0
        %979 = vmatmul.mubr.f32.gmra.mrb[0].mxu0 %v889
        %v980 = vpop.f32.mrb[0].mxu0
        %v981 = vadd.f32 %v853, %v980
        %v982 = vpop.f32.mrb[0].mxu0
        %983 = vmatprep.mubr.f32.mxu0 0.0
        %984 = vmatmul.mubr.f32.gmra.mrb[0].mxu0 %v892
        %v985 = vpop.f32.mrb[0].mxu0
        %v986 = vadd.f32 %v858, %v985
        %v987 = vpop.f32.mrb[0].mxu0
        %988 = vmatprep.mubr.f32.mxu0 0.0
        %989 = vmatmul.mubr.f32.gmra.mrb[0].mxu0 %v895
        %v990 = vpop.f32.mrb[0].mxu0
        %v991 = vadd.f32 %v863, %v990
        %v992 = vpop.f32.mrb[0].mxu0
        %993 = vmatprep.mubr.f32.mxu0 0.0
        %994 = vmatmul.mubr.f32.gmra.mrb[0].mxu0 %v898
        %v995 = vpop.f32.mrb[0].mxu0
        %v996 = vadd.f32 %v868, %v995
        %v997 = vpop.f32.mrb[0].mxu0
        %998 = vmatprep.mubr.f32.mxu0 0.0
        %999 = vmatmul.mubr.f32.gmra.mrb[0].mxu0 %v901
        %v1000 = vpop.f32.mrb[0].mxu0
        %v1001 = vadd.f32 %v873, %v1000
        %v1002 = vpop.f32.mrb[0].mxu0
        %1003 = vmatprep.mubr.f32.mxu0 0.0
        %1004 = vmatmul.mubr.f32.gmra.mrb[0].mxu0 %v904
        %v1005 = vpop.f32.mrb[0].mxu0
        %v1006 = vadd.f32 %v878, %v1005
        %v1007 = vpop.f32.mrb[0].mxu0
        %1008 = vmatprep.mubr.f32.mxu0 0.0
        %1009 = vmatmul.mubr.f32.gmra.mrb[0].mxu0 %v907
        %v1010 = vpop.f32.mrb[0].mxu0
        %v1011 = vadd.f32 %v883, %v1010
        %v1012 = vpop.f32.mrb[0].mxu0
        %1013 = vdwg.mxu0
        %v1014 = vtanh.pop %v976
        %v1015 = vtanh.pop %v981
        %v1016 = vtanh.pop %v986
        %v1017 = vtanh.pop %v991
        %v1018 = vmax.f32 %v996, 0.0
        %v1019 = vmax.f32 %v1001, 0.0
        %v1020 = vmax.f32 %v1006, 0.0
        %v1021 = vmax.f32 %v1011, 0.0
        %v1022 = vld [vmem:[%s6] sm:$0xff]
        %v1023 = vld [vmem:[%s6 + $0x8] sm:$0xff]
        %v1024 = vld [vmem:[%s6 + $0x10] sm:$0xff]
        %v1025 = vld [vmem:[%s6 + $0x18] sm:$0xff]
        %v1026 = vld [vmem:[%s10] sm:$0xff]
        %v1027 = vld [vmem:[%s10 + $0x8] sm:$0xff]
        %v1028 = vld [vmem:[%s10 + $0x10] sm:$0xff]
        %v1029 = vld [vmem:[%s10 + $0x18] sm:$0xff]
        %1031 = vset.pattern.permute.xlu0 0
        %1032 = vperm.xlu0 %1031, %v1026
        %v1033 = vpop.permute.xlu0 %1032
        %1036 = vset.pattern.permute.xlu0 0
        %1037 = vperm.xlu0 %1036, %v1027
        %v1038 = vpop.permute.xlu0 %1037
        %1041 = vset.pattern.permute.xlu0 0
        %1042 = vperm.xlu0 %1041, %v1028
        %v1043 = vpop.permute.xlu0 %1042
        %1046 = vset.pattern.permute.xlu0 0
        %1047 = vperm.xlu0 %1046, %v1029
        %v1048 = vpop.permute.xlu0 %1047
        %v1051 = vsel %vm691, %v1022, 0
        %v1054 = vsel %vm691, %v1023, 0
        %v1057 = vsel %vm691, %v1024, 0
        %v1060 = vsel %vm691, %v1025, 0
        %1062 = vmatprep.subr.mxu0 0.0
        %1063 = vmatpush1.msra.mxu0 %v1014
        %1064 = vmatprep.subr.mxu0 0.0
        %1065 = vmatpush1.msra.mxu0 %v1015
        %1066 = vmatprep.subr.mxu0 0.0
        %1067 = vmatpush1.msra.mxu0 %v1016
        %1068 = vmatprep.subr.mxu0 0.0
        %1069 = vmatpush1.msra.mxu0 %v1017
        %1070 = vmatprep.subr.mxu0 0.0
        %1071 = vmatpush1.msra.mxu0 %v1018
        %1072 = vmatprep.subr.mxu0 0.0
        %1073 = vmatpush1.msra.mxu0 %v1019
        %1074 = vmatprep.subr.mxu0 0.0
        %1075 = vmatpush1.msra.mxu0 %v1020
        %1076 = vmatprep.subr.mxu0 0.0
        %1077 = vmatpush1.msra.mxu0 %v1021
        %1078 = vmatprep.subr.mxu0 0.0
        %1079 = vmatpush1.msra.mxu0 0.0
        %1080 = vmatprep.subr.mxu0 0.0
        %1081 = vmatpush1.msra.mxu0 0.0
        %1082 = vmatprep.subr.mxu0 0.0
        %1083 = vmatpush1.msra.mxu0 0.0
        %1084 = vmatprep.subr.mxu0 0.0
        %1085 = vmatpush1.msra.mxu0 0.0
        %1086 = vmatprep.subr.mxu0 0.0
        %1087 = vmatpush1.msra.mxu0 0.0
        %1088 = vmatprep.subr.mxu0 0.0
        %1089 = vmatpush1.msra.mxu0 0.0
        %1090 = vmatprep.subr.mxu0 0.0
        %1091 = vmatpush1.msra.mxu0 0.0
        %1092 = vmatprep.subr.mxu0 0.0
        %1093 = vmatpush1.msra.mxu0 0.0
        %1094 = vmatprep.subr.mxu0 0.0
        %1095 = vmatpush1.msra.mxu0 0.0
        %1096 = vmatprep.subr.mxu0 0.0
        %1097 = vmatpush1.msra.mxu0 0.0
        %1098 = vmatprep.subr.mxu0 0.0
        %1099 = vmatpush1.msra.mxu0 0.0
        %1100 = vmatprep.subr.mxu0 0.0
        %1101 = vmatpush1.msra.mxu0 0.0
        %1102 = vmatprep.subr.mxu0 0.0
        %1103 = vmatpush1.msra.mxu0 0.0
        %1104 = vmatprep.subr.mxu0 0.0
        %1105 = vmatpush1.msra.mxu0 0.0
        %1106 = vmatprep.subr.mxu0 0.0
        %1107 = vmatpush1.msra.mxu0 0.0
        %1108 = vmatprep.subr.mxu0 0.0
        %1109 = vmatpush1.msra.mxu0 0.0
        %1110 = vmatprep.subr.mxu0 0.0
        %1111 = vmatpush1.msra.mxu0 0.0
        %1112 = vmatprep.subr.mxu0 0.0
        %1113 = vmatpush1.msra.mxu0 0.0
        %1114 = vmatprep.subr.mxu0 0.0
        %1115 = vmatpush1.msra.mxu0 0.0
        %1116 = vmatprep.subr.mxu0 0.0
        %1117 = vmatpush1.msra.mxu0 0.0
        %1118 = vmatprep.subr.mxu0 0.0
        %1119 = vmatpush1.msra.mxu0 0.0
        %1120 = vmatprep.subr.mxu0 0.0
        %1121 = vmatpush1.msra.mxu0 0.0
        %1122 = vmatprep.subr.mxu0 0.0
        %1123 = vmatpush1.msra.mxu0 0.0
        %1124 = vmatprep.subr.mxu0 0.0
        %1125 = vmatpush1.msra.mxu0 0.0
        %1126 = vmatprep.mubr.f32.mxu0 0.0
        %1127 = vmatmul.mubr.f32.gmra.mrb[0].mxu0 %v1051
        %v1128 = vpop.f32.mrb[0].mxu0
        %v1129 = vadd.f32 %v1033, %v1128
        %v1130 = vpop.f32.mrb[0].mxu0
        %1131 = vmatprep.mubr.f32.mxu0 0.0
        %1132 = vmatmul.mubr.f32.gmra.mrb[0].mxu0 %v1054
        %v1133 = vpop.f32.mrb[0].mxu0
        %v1134 = vadd.f32 %v1038, %v1133
        %v1135 = vpop.f32.mrb[0].mxu0
        %1136 = vmatprep.mubr.f32.mxu0 0.0
        %1137 = vmatmul.mubr.f32.gmra.mrb[0].mxu0 %v1057
        %v1138 = vpop.f32.mrb[0].mxu0
        %v1139 = vadd.f32 %v1043, %v1138
        %v1140 = vpop.f32.mrb[0].mxu0
        %1141 = vmatprep.mubr.f32.mxu0 0.0
        %1142 = vmatmul.mubr.f32.gmra.mrb[0].mxu0 %v1060
        %v1143 = vpop.f32.mrb[0].mxu0
        %v1144 = vadd.f32 %v1048, %v1143
        %v1145 = vpop.f32.mrb[0].mxu0
        %1146 = vdwg.mxu0
        %v1147 = vsub.f32 %v423, %v1139
        %v1148 = vsub.f32 %v424, %v1144
        %1150 = vset.pattern.permute.xlu0 0
        %1151 = vperm.xlu0 %1150, %v427
        %v1152 = vpop.permute.xlu0 %1151
        %1155 = vset.pattern.permute.xlu0 0
        %1156 = vperm.xlu0 %1155, %v428
        %v1157 = vpop.permute.xlu0 %1156
        %v1159 = vmul.f32 %v1152, %v1147
        %v1160 = vmul.f32 %v1157, %v1148
        %v1161 = vsub.f32 0.0, %v1129
        %v1162 = vsub.f32 0.0, %v1134
        %v1163 = vmul.f32 %v1161, 1.442695
        %v1164 = vpow.pop %v1163
        %v1165 = vmul.f32 %v1162, 1.442695
        %v1166 = vpow.pop %v1165
        %v1167 = vmul.f32 %v1159, %v1164
        %v1168 = vmul.f32 %v1160, %v1166
        %v1169 = vadd.f32 %v439, %v1167
        %v1170 = vadd.f32 %v440, %v1168
        %v1171 = vsub.f32 0.0, %v427
        %v1172 = vsub.f32 0.0, %v428
        %1174 = vset.pattern.permute.xlu0 0
        %1175 = vperm.xlu0 %1174, %v1171
        %v1176 = vpop.permute.xlu0 %1175
        %1179 = vset.pattern.permute.xlu0 0
        %1180 = vperm.xlu0 %1179, %v1172
        %v1181 = vpop.permute.xlu0 %1180
        %v1183 = vmul.f32 %v1176, %v1129
        %v1184 = vmul.f32 %v1181, %v1134
        %1185 = vst [vmem:[%s422] sm:$0xff] %v1169
        %1186 = vst [vmem:[%s422 + $0x8] sm:$0xff] %v1170
        %1187 = vst [vmem:[%s422 + $0x10] sm:$0xff] %v1183
        %1188 = vst [vmem:[%s422 + $0x18] sm:$0xff] %v1184
        %s1189 = sand.u32 %s269, 1
        %s1190 = scalar_lea.sflag [#allocation4], %s1189
        %s1191 = sand.u32 %s269, 1
        %s1192 = smul.addr %s1191, 32
        %s1193 = scalar_lea.vmem [#allocation3], %s1192
        // Predicated region
        $region103: #{tpu_custom_call.1} parent=97 // pred_check
          %p1194 = pneg %p279
        $region104: #{tpu_custom_call.1} parent=97 // pred_check_branch
          %1196 = sbr.rel (%p1194) target = $region106
        $region105: #{tpu_custom_call.1} parent=97 // pred_region
          %s1198 = ssub.s32 512, 512
          %1199 = vsyncadd %s1190, %s1198
          %s1200 = smul.addr %s25, 128
          %s1201 = scalar_lea.hbm %s11, %s1200
          %s1202 = sshll.u32 %s1193, 4
          %s1203 = int_to_ptr.vmem [resolvable:$true] %s1202
          %1208 = dma.vmem_to_hbm [thread:$0]  %s1203, 512, %s1201, %s1190, 128, 256, 8
        $region106: #{tpu_custom_call.1} parent=97 // pred_fallthru
          _
      $region98: #{tpu_custom_call.1} parent=5 // pred_fallthru
        _
      %p1209 = scmp.le.s32.totalorder 2, %s20
      // Predicated region
      $region107: #{tpu_custom_call.1} parent=5 // pred_check
        %p1210 = pneg %p1209
      $region108: #{tpu_custom_call.1} parent=5 // pred_check_branch
        %1212 = sbr.rel (%p1210) target = $region110
      $region109: #{tpu_custom_call.1} parent=5 // pred_region
        %s1213 = ssub.s32 %s20, 2
        // Predicated region
        $region111: #{tpu_custom_call.1} parent=109 // pred_check
          %p1214 = pneg %p285
        $region112: #{tpu_custom_call.1} parent=109 // pred_check_branch
          %1216 = sbr.rel (%p1214) target = $region114
        $region113: #{tpu_custom_call.1} parent=109 // pred_region
          %s1217 = sand.u32 %s270, 1
          %s1218 = scalar_lea.sflag [#allocation4], %s1217
          %s1219 = sand.u32 %s270, 1
          %s1220 = smul.addr %s1219, 32
          %s1221 = scalar_lea.vmem [#allocation3], %s1220
          %1222 = dma.done %s1218, 512
        $region114: #{tpu_custom_call.1} parent=109 // pred_fallthru
          _
      $region110: #{tpu_custom_call.1} parent=5 // pred_fallthru
        _
    $region6: #{tpu_custom_call.1} parent=1 // loop_footer
      %s24 = sadd.s32 1, %s20
    $region7: #{tpu_custom_call.1} parent=1 // loop_footer_branch
      %19 = sbr.rel target = $region3
    $region8: #{tpu_custom_call.1} parent=1 // loop_exit
      _
    %1223 = vsyncpa [#allocation4], 1
    %s1224 = scalar_lea.sflag [#allocation4], 1
    %1225 = vsyncpa %s1224, 1

</llo_original>
